<compile_context>
chip_gen: v7x
topology: tpu7x:2x2x1
jax: 0.10.0
libtpu: 0.0.40
codegen_flags: <defaults>
</compile_context>

<pallas_src>
import jax
import jax.numpy as jnp
from jax.experimental import pallas as pl
from jax.experimental.pallas import tpu as pltpu


HIDDEN = 128  # fixed by common_fc = nn.Linear(128, num_classes)


def _round_up(n, m):
    return ((n + m - 1) // m) * m


# ----------------------------------------------------------------------------
# Fused kernel: both encoders + common_fc, K-tiled with an f32 accumulator
# ----------------------------------------------------------------------------
def _fused_kernel(x_ref, wf_ref, bf_ref, wc_ref, bc_ref,
                  feats_ref, pred_ref, acc_ref):
    ki = pl.program_id(1)

    @pl.when(ki == 0)
    def _init():
        acc_ref[...] = jnp.zeros_like(acc_ref)

    # Encoder matmul, both encoders fused along N ([D,128]+[D,128] -> [D,256]).
    acc_ref[...] += jnp.dot(x_ref[...].astype(wf_ref.dtype), wf_ref[...],
                            preferred_element_type=jnp.float32)

    @pl.when(ki == pl.num_programs(1) - 1)
    def _finalize():
        tb = acc_ref.shape[0]
        h = acc_ref.shape[1] // 2
        # f32 epilogue (bias + ReLU); one 256-lane-wide unmasked store.
        feats = jnp.maximum(acc_ref[...] + bf_ref[...], 0.0)        # [tb, 2H]
        feats_ref[...] = feats

        # common_fc(concat([fa, fv], dim=0)): ONE stacked [2*tb, H] matmul, stored
        # as a [2, tb, NCP] slab so each half lands at sublane offset 0 (tb % 8 == 0,
        # so the reshape is layout-preserving).
        stacked = jnp.concatenate([feats[:, :h], feats[:, h:]], axis=0)   # [2*tb, H]
        pred = jnp.dot(stacked.astype(wc_ref.dtype), wc_ref[...],
                       preferred_element_type=jnp.float32) + bc_ref[...]  # [2*tb, NCP]
        pred_ref[...] = pred.reshape(2, tb, pred.shape[-1])


def fused_forward(x_flat, wf, bf, wc, bc, *, tb=None, tk=None):
    """x_flat: [B, D] f32.  wf: [D, 2H], bf: [1, 2H], wc: [H, NCP], bc: [1, NCP].

    Returns (feats [B, 2H] f32, pred [2, B, NCP] f32)."""
    B, D = x_flat.shape
    H2 = wf.shape[1]
    H = H2 // 2
    NCP = wc.shape[1]

    # Tile sizes: sublane-aligned row tiles, lane-aligned K tiles.
    if tb is None:
        tb = min(_round_up(B, 8), 256)
    if tk is None:
        tk = min(_round_up(D, 128), 512)
    B_pad = _round_up(B, tb)
    D_pad = _round_up(D, tk)

    if (B_pad, D_pad) != (B, D):
        x_flat = jnp.pad(x_flat, ((0, B_pad - B), (0, D_pad - D)))
    if D_pad != D:
        wf = jnp.pad(wf, ((0, D_pad - D), (0, 0)))

    grid = (B_pad // tb, D_pad // tk)

    # Explicit VMEM budget: double-buffered ins/outs + accumulator, with headroom,
    # clamped to stay well under v7x's 64 MiB physical VMEM.
    wbytes = jnp.dtype(wf.dtype).itemsize
    est = (2 * (tb * tk * 4 + tk * H2 * wbytes + H2 * 4 + H * NCP * wbytes + NCP * 4)
           + 2 * (tb * H2 * 4 + 2 * tb * NCP * 4)
           + tb * H2 * 4)
    vmem_limit = int(min(max(2 * est, 16 << 20), 48 << 20))

    feats, pred = pl.pallas_call(
        _fused_kernel,
        out_shape=(
            jax.ShapeDtypeStruct((B_pad, H2), jnp.float32),        # feats [fa | fv]
            jax.ShapeDtypeStruct((2, B_pad, NCP), jnp.float32),    # pred (padded lanes)
        ),
        grid_spec=pltpu.PrefetchScalarGridSpec(
            num_scalar_prefetch=0,
            grid=grid,
            in_specs=[
                pl.BlockSpec((tb, tk), lambda bi, ki: (bi, ki)),   # x tile
                pl.BlockSpec((tk, H2), lambda bi, ki: (ki, 0)),    # fused enc weights
                pl.BlockSpec((1, H2), lambda bi, ki: (0, 0)),      # fused enc bias
                pl.BlockSpec((H, NCP), lambda bi, ki: (0, 0)),     # common_fc weight
                pl.BlockSpec((1, NCP), lambda bi, ki: (0, 0)),     # common_fc bias
            ],
            out_specs=(
                pl.BlockSpec((tb, H2), lambda bi, ki: (bi, 0)),
                pl.BlockSpec((2, tb, NCP), lambda bi, ki: (0, bi, 0)),
            ),
            scratch_shapes=[pltpu.VMEM((tb, H2), jnp.float32)],
        ),
        compiler_params=pltpu.CompilerParams(
            dimension_semantics=("parallel", "arbitrary"),
            vmem_limit_bytes=vmem_limit,
        ),
    )(x_flat, wf, bf, wc, bc)

    return feats[:B], pred[:, :B, :]


# ----------------------------------------------------------------------------
# Parameter construction / one-time layout preparation
# ----------------------------------------------------------------------------
def make_params(key, in_dim, hidden, num_classes):
    """Per-encoder layout (matches the PyTorch module's logical parameters)."""
    ks = jax.random.split(key, 6)
    s = 0.02
    return {
        "enc0_wf": s * jax.random.normal(ks[0], (in_dim, hidden), jnp.float32),
        "enc0_bf": s * jax.random.normal(ks[1], (1, hidden), jnp.float32),
        "enc1_wf": s * jax.random.normal(ks[2], (in_dim, hidden), jnp.float32),
        "enc1_bf": s * jax.random.normal(ks[3], (1, hidden), jnp.float32),
        "fc_w":    s * jax.random.normal(ks[4], (hidden, num_classes), jnp.float32),
        "fc_b":    s * jax.random.normal(ks[5], (1, num_classes), jnp.float32),
    }


def prepare_params(params, weights_dtype=jnp.bfloat16):
    """One-time layout transform: fuse encoder weights along N, lane-pad common_fc.

    weights_dtype=bf16 by default: wf dominates HBM traffic for small B and the MXU
    takes bf16 natively on v5e/v6e/v7x while accumulating in f32 (the bias/ReLU
    epilogue stays f32, so no VPU bf16 dependence on v5e)."""
    nc = params["fc_w"].shape[1]
    ncp = _round_up(max(nc, 1), 128)
    return {
        "wf": jnp.concatenate([params["enc0_wf"], params["enc1_wf"]],
                              axis=1).astype(weights_dtype),               # [D, 2H]
        "bf": jnp.concatenate([params["enc0_bf"], params["enc1_bf"]],
                              axis=1).astype(jnp.float32),                 # [1, 2H]
        "wc": jnp.pad(params["fc_w"],
                      ((0, 0), (0, ncp - nc))).astype(weights_dtype),      # [H, NCP]
        "bc": jnp.pad(params["fc_b"],
                      ((0, 0), (0, ncp - nc))).astype(jnp.float32),        # [1, NCP]
        "num_classes": nc,
    }


# ----------------------------------------------------------------------------
# Encoder_Type_Model forward
# ----------------------------------------------------------------------------
def encoder_type_model_forward(x, prepared):
    """x: [B, C, H, W] float32. Returns the same dict structure as the PyTorch module."""
    B = x.shape[0]
    x_flat = x.reshape(B, -1).astype(jnp.float32)          # matches torch .view(B, -1)

    feats, pred_padded = fused_forward(
        x_flat, prepared["wf"], prepared["bf"], prepared["wc"], prepared["bc"])

    h = feats.shape[1] // 2
    feat_a = feats[:, :h]
    feat_v = feats[:, h:]
    nc = prepared["num_classes"]
    # [2, B, NCP] -> drop lane padding -> [2B, nc] (rows = [fa_0..fa_{B-1}, fv_0..fv_{B-1}],
    # i.e. concat along dim 0, matching torch.concatenate default).
    pred = pred_padded[:, :, :nc].reshape(2 * B, nc)

    return {"preds": {"combined": pred},
            "features": {"c": feat_a, "g": feat_v}}


# ----------------------------------------------------------------------------
# Reference (plain JAX) with matching numerics, for validation
# ----------------------------------------------------------------------------
def _reference_forward(x, prepared):
    B = x.shape[0]
    x_flat = x.reshape(B, -1).astype(jnp.float32)
    wf, bf, wc, bc = prepared["wf"], prepared["bf"], prepared["wc"], prepared["bc"]
    nc = prepared["num_classes"]
    feats = jnp.maximum(
        jnp.dot(x_flat.astype(wf.dtype), wf, preferred_element_type=jnp.float32) + bf,
        0.0)
    h = feats.shape[1] // 2
    fa, fv = feats[:, :h], feats[:, h:]
    stacked = jnp.concatenate([fa, fv], axis=0)
    pred = (jnp.dot(stacked.astype(wc.dtype), wc,
                    preferred_element_type=jnp.float32) + bc)[:, :nc]
    return fa, fv, pred


if __name__ == "__main__":
    B, C, Hs, Ws = 2, 4, 16, 16
    NUM_CLASSES = 10

    key = jax.random.PRNGKey(0)
    k_x, k_p = jax.random.split(key)
    x = jax.random.normal(k_x, (B, C, Hs, Ws), jnp.float32)
    params = make_params(k_p, C * Hs * Ws, HIDDEN, NUM_CLASSES)

    # --- default (bf16 weights) path ----------------------------------------
    prepared = prepare_params(params)                       # bf16 weights
    out = encoder_type_model_forward(x, prepared)
    out = jax.tree_util.tree_map(jax.block_until_ready, out)

    assert out["preds"]["combined"].shape == (2 * B, NUM_CLASSES)
    assert out["features"]["c"].shape == (B, HIDDEN)
    assert out["features"]["g"].shape == (B, HIDDEN)

    fa_r, fv_r, pred_r = _reference_forward(x, prepared)    # same bf16 numerics
    assert jnp.allclose(out["features"]["c"], fa_r, atol=1e-3)
    assert jnp.allclose(out["features"]["g"], fv_r, atol=1e-3)
    assert jnp.allclose(out["preds"]["combined"], pred_r, atol=1e-3)

    # --- f32-weights path, checked against the exact f32 module semantics ----
    prepared32 = prepare_params(params, weights_dtype=jnp.float32)
    out32 = encoder_type_model_forward(x, prepared32)
    out32 = jax.tree_util.tree_map(jax.block_until_ready, out32)

    x_flat = x.reshape(B, -1)
    fa = jnp.maximum(x_flat @ params["enc0_wf"] + params["enc0_bf"], 0.0)
    fv = jnp.maximum(x_flat @ params["enc1_wf"] + params["enc1_bf"], 0.0)
    pred_f32 = jnp.concatenate([fa, fv], axis=0) @ params["fc_w"] + params["fc_b"]
    assert jnp.allclose(out32["features"]["c"], fa, atol=1e-4)
    assert jnp.allclose(out32["features"]["g"], fv, atol=1e-4)
    assert jnp.allclose(out32["preds"]["combined"], pred_f32, atol=1e-4)

    print("KERNEL_OK")
</pallas_src>

<mosaic_0001>
module attributes {stable_mosaic.version = 11 : i64} {
  func.func @_fused_kernel(%arg0: i32, %arg1: i32, %arg2: memref<8x512xf32, #tpu.memory_space<vmem>>, %arg3: memref<512x256xbf16, #tpu.memory_space<vmem>>, %arg4: memref<1x256xf32, #tpu.memory_space<vmem>>, %arg5: memref<128x128xbf16, #tpu.memory_space<vmem>>, %arg6: memref<1x128xf32, #tpu.memory_space<vmem>>, %arg7: memref<8x256xf32, #tpu.memory_space<vmem>>, %arg8: memref<2x8x128xf32, #tpu.memory_space<vmem>>, %arg9: memref<8x256xf32, #tpu.memory_space<vmem>>) attributes {dimension_semantics = [#tpu.dimension_semantics<parallel>, #tpu.dimension_semantics<arbitrary>], iteration_bounds = array<i64: 1, 2>, scalar_prefetch = 0 : i64, scratch_operands = 1 : i64, tpu.core_type = #tpu.core_type<tc>, window_params = [{transform_indices = @transform_0, window_bounds = array<i64: 8, 512>}, {transform_indices = @transform_1, window_bounds = array<i64: 512, 256>}, {pipeline_mode = #tpu.pipeline_mode<synchronous>, transform_indices = @transform_2, window_bounds = array<i64: 1, 256>}, {pipeline_mode = #tpu.pipeline_mode<synchronous>, transform_indices = @transform_3, window_bounds = array<i64: 128, 128>}, {pipeline_mode = #tpu.pipeline_mode<synchronous>, transform_indices = @transform_4, window_bounds = array<i64: 1, 128>}, {transform_indices = @transform_5, window_bounds = array<i64: 8, 256>}, {transform_indices = @transform_6, window_bounds = array<i64: 2, 8, 128>}]} {
    %c0_i32 = arith.constant 0 : i32
    %0 = arith.cmpi eq, %arg1, %c0_i32 : i32
    %1 = arith.extui %0 : i1 to i32
    %c0_i32_0 = arith.constant 0 : i32
    %2 = arith.cmpi ne, %1, %c0_i32_0 : i32
    scf.if %2 {
      %cst_9 = arith.constant 0.000000e+00 : f32
      %13 = vector.broadcast %cst_9 : f32 to vector<8x256xf32>
      %c0_10 = arith.constant 0 : index
      %c0_11 = arith.constant 0 : index
      %14 = vector.load %arg9[%c0_10, %c0_11] : memref<8x256xf32, #tpu.memory_space<vmem>>, vector<8x256xf32>
      tpu.vector_store %arg9[%c0_10, %c0_11], %13 {strides = array<i32>} : memref<8x256xf32, #tpu.memory_space<vmem>>, vector<8x256xf32>,
    } else {
    }
    %c0 = arith.constant 0 : index
    %c0_1 = arith.constant 0 : index
    %3 = vector.load %arg9[%c0, %c0_1] : memref<8x256xf32, #tpu.memory_space<vmem>>, vector<8x256xf32>
    %c0_2 = arith.constant 0 : index
    %c0_3 = arith.constant 0 : index
    %4 = vector.load %arg2[%c0_2, %c0_3] : memref<8x512xf32, #tpu.memory_space<vmem>>, vector<8x512xf32>
    %5 = arith.truncf %4 : vector<8x512xf32> to vector<8x512xbf16>
    %c0_4 = arith.constant 0 : index
    %c0_5 = arith.constant 0 : index
    %6 = vector.load %arg3[%c0_4, %c0_5] : memref<512x256xbf16, #tpu.memory_space<vmem>>, vector<512x256xbf16>
    %cst = arith.constant dense<0.000000e+00> : vector<8x256xf32>
    %7 = tpu.matmul %5, %6, %cst {dimension_numbers = #tpu.dot_dimension_numbers<[1], [0], [0], [1], [0, 0, 1, 1], [], []>} : vector<8x512xbf16>, vector<512x256xbf16>, vector<8x256xf32> -> vector<8x256xf32>
    %8 = arith.addf %3, %7 : vector<8x256xf32>
    %c0_6 = arith.constant 0 : index
    %c0_7 = arith.constant 0 : index
    %9 = vector.load %arg9[%c0_6, %c0_7] : memref<8x256xf32, #tpu.memory_space<vmem>>, vector<8x256xf32>
    tpu.vector_store %arg9[%c0_6, %c0_7], %8 {strides = array<i32>} : memref<8x256xf32, #tpu.memory_space<vmem>>, vector<8x256xf32>,
    %c1_i32 = arith.constant 1 : i32
    %10 = arith.cmpi eq, %arg1, %c1_i32 : i32
    %11 = arith.extui %10 : i1 to i32
    %c0_i32_8 = arith.constant 0 : i32
    %12 = arith.cmpi ne, %11, %c0_i32_8 : i32
    scf.if %12 {
      %c0_9 = arith.constant 0 : index
      %c0_10 = arith.constant 0 : index
      %13 = vector.load %arg9[%c0_9, %c0_10] : memref<8x256xf32, #tpu.memory_space<vmem>>, vector<8x256xf32>
      %c0_11 = arith.constant 0 : index
      %c0_12 = arith.constant 0 : index
      %14 = vector.load %arg4[%c0_11, %c0_12] : memref<1x256xf32, #tpu.memory_space<vmem>>, vector<1x256xf32>
      %15 = vector.broadcast %14 : vector<1x256xf32> to vector<8x256xf32>
      %16 = arith.addf %13, %15 : vector<8x256xf32>
      %cst_13 = arith.constant 0.000000e+00 : f32
      %17 = vector.broadcast %cst_13 : f32 to vector<8x256xf32>
      %18 = arith.maximumf %16, %17 : vector<8x256xf32>
      %c0_14 = arith.constant 0 : index
      %c0_15 = arith.constant 0 : index
      %19 = vector.load %arg7[%c0_14, %c0_15] : memref<8x256xf32, #tpu.memory_space<vmem>>, vector<8x256xf32>
      tpu.vector_store %arg7[%c0_14, %c0_15], %18 {strides = array<i32>} : memref<8x256xf32, #tpu.memory_space<vmem>>, vector<8x256xf32>,
      %20 = vector.extract_strided_slice %18 {offsets = [0, 0], sizes = [8, 128], strides = [1, 1]} : vector<8x256xf32> to vector<8x128xf32>
      %21 = vector.extract_strided_slice %18 {offsets = [0, 128], sizes = [8, 128], strides = [1, 1]} : vector<8x256xf32> to vector<8x128xf32>
      %22 = tpu.concatenate %20, %21 in 0 : vector<8x128xf32>, vector<8x128xf32> -> vector<16x128xf32>
      %23 = arith.truncf %22 : vector<16x128xf32> to vector<16x128xbf16>
      %c0_16 = arith.constant 0 : index
      %c0_17 = arith.constant 0 : index
      %24 = vector.load %arg5[%c0_16, %c0_17] : memref<128x128xbf16, #tpu.memory_space<vmem>>, vector<128x128xbf16>
      %cst_18 = arith.constant dense<0.000000e+00> : vector<16x128xf32>
      %25 = tpu.matmul %23, %24, %cst_18 {dimension_numbers = #tpu.dot_dimension_numbers<[1], [0], [0], [1], [0, 0, 1, 1], [], []>} : vector<16x128xbf16>, vector<128x128xbf16>, vector<16x128xf32> -> vector<16x128xf32>
      %c0_19 = arith.constant 0 : index
      %c0_20 = arith.constant 0 : index
      %26 = vector.load %arg6[%c0_19, %c0_20] : memref<1x128xf32, #tpu.memory_space<vmem>>, vector<1x128xf32>
      %27 = vector.broadcast %26 : vector<1x128xf32> to vector<16x128xf32>
      %28 = arith.addf %25, %27 : vector<16x128xf32>
      %29 = vector.shape_cast %28 : vector<16x128xf32> to vector<2x8x128xf32>
      %c0_21 = arith.constant 0 : index
      %c0_22 = arith.constant 0 : index
      %c0_23 = arith.constant 0 : index
      %30 = vector.load %arg8[%c0_21, %c0_22, %c0_23] : memref<2x8x128xf32, #tpu.memory_space<vmem>>, vector<2x8x128xf32>
      tpu.vector_store %arg8[%c0_21, %c0_22, %c0_23], %29 {strides = array<i32>} : memref<2x8x128xf32, #tpu.memory_space<vmem>>, vector<2x8x128xf32>,
    } else {
    }
    return
  }
  func.func @transform_0(%arg0: i32, %arg1: i32) -> (i32, i32) {
    %c0_i32 = arith.constant 0 : i32
    return %arg0, %arg1 : i32, i32
  }
  func.func @transform_1(%arg0: i32, %arg1: i32) -> (i32, i32) {
    %c0_i32 = arith.constant 0 : i32
    %c0_i32_0 = arith.constant 0 : i32
    return %arg1, %c0_i32 : i32, i32
  }
  func.func @transform_2(%arg0: i32, %arg1: i32) -> (i32, i32) {
    %c0_i32 = arith.constant 0 : i32
    %c0_i32_0 = arith.constant 0 : i32
    %c0_i32_1 = arith.constant 0 : i32
    return %c0_i32, %c0_i32_0 : i32, i32
  }
  func.func @transform_3(%arg0: i32, %arg1: i32) -> (i32, i32) {
    %c0_i32 = arith.constant 0 : i32
    %c0_i32_0 = arith.constant 0 : i32
    %c0_i32_1 = arith.constant 0 : i32
    return %c0_i32, %c0_i32_0 : i32, i32
  }
  func.func @transform_4(%arg0: i32, %arg1: i32) -> (i32, i32) {
    %c0_i32 = arith.constant 0 : i32
    %c0_i32_0 = arith.constant 0 : i32
    %c0_i32_1 = arith.constant 0 : i32
    return %c0_i32, %c0_i32_0 : i32, i32
  }
  func.func @transform_5(%arg0: i32, %arg1: i32) -> (i32, i32) {
    %c0_i32 = arith.constant 0 : i32
    %c0_i32_0 = arith.constant 0 : i32
    return %arg0, %c0_i32 : i32, i32
  }
  func.func @transform_6(%arg0: i32, %arg1: i32) -> (i32, i32, i32) {
    %c0_i32 = arith.constant 0 : i32
    %c0_i32_0 = arith.constant 0 : i32
    %c0_i32_1 = arith.constant 0 : i32
    return %c0_i32, %arg0, %c0_i32_0 : i32, i32, i32
  }
}

</mosaic_0001>

<llo_original>
// kernel: tpu_custom_call.1
$region0: #{tpu_custom_call.1}
  #allocation0 [shape = 'u32[]', space=smem, size = 0x4, offset = 0x4, fixed_abs, tag = 'smem constant byte address 0x4 - core index']
  #allocation1 [shape = 'u32[144,128]{1,0:T(1,128)}', space=vmem, size = 0x12000, scoped, tag = 'internal scratch']
  #allocation2 [shape = 'f32[8,256]{1,0:T(8,128)}', space=vmem, size = 0x2000, scoped, tag = 'scratch operand']
  %s0 = inlined_call_operand.hbm [shape: f32[8,1024], index: 0, kind: input, shape index: {}]
  %s1 = inlined_call_operand.hbm [shape: bf16[1024,256], index: 1, kind: input, shape index: {}]
  %s2 = inlined_call_operand.vmem [shape: f32[1,256], index: 2, kind: input, shape index: {}]
  %s3 = inlined_call_operand.hbm [shape: bf16[128,128], index: 3, kind: input, shape index: {}]
  %s4 = inlined_call_operand.vmem [shape: f32[1,128], index: 4, kind: input, shape index: {}]
  %s5 = inlined_call_operand.hbm [shape: f32[8,256], index: 5, kind: output, shape index: {0}]
  %s6 = inlined_call_operand.hbm [shape: f32[2,8,128], index: 6, kind: output, shape index: {1}]
  %7 = xla_tuple %s5, %s6
  %s8 = sld [smem:[#allocation0]]
  $region81: #{tpu_custom_call.1} parent=0
    _
  %s10 = ssub.s32 1, %s8
  %s11 = scalar_select 0, %s10, %s8
  $region1: #{tpu_custom_call.1} parent=0
    #allocation3 [shape = 'u8[32768]{0}', space=vmem, size = 0x8000, scoped, tag = 'input window, operand 0']
    #allocation4 [shape = 's32[2]{0}', space=sflag, size = 0x8, scoped, tag = 'scoped memory for tpu_custom_call.1']
    #allocation5 [shape = 's32[2]{0}', space=sflag, size = 0x8, scoped, tag = 'scoped memory for tpu_custom_call.1']
    #allocation6 [shape = 'u8[524288]{0}', space=vmem, size = 0x80000, scoped, tag = 'input window, operand 1']
    #allocation7 [shape = 's32[2]{0}', space=sflag, size = 0x8, scoped, tag = 'scoped memory for tpu_custom_call.1']
    #allocation8 [shape = 'u8[32768]{0}', space=vmem, size = 0x8000, scoped, tag = 'input window, operand 3, single buffered']
    #allocation9 [shape = 'u8[8192]{0}', space=vmem, size = 0x2000, scoped, tag = 'output window, operand 0, single buffered']
    #allocation10 [shape = 'u8[8192]{0}', space=vmem, size = 0x2000, scoped, tag = 'output window, operand 1, single buffered']
    #allocation11 [shape = 's32[1]{0}', space=sflag, size = 0x4, scoped, tag = 'scoped memory for tpu_custom_call.1']
    %12 = vsyncpa [#allocation4], 0
    %s13 = scalar_lea.sflag [#allocation4], 1
    %14 = vsyncpa %s13, 0
    %15 = vsyncpa [#allocation7], 0
    %s16 = scalar_lea.sflag [#allocation7], 1
    %17 = vsyncpa %s16, 0
    %18 = vsyncpa [#allocation5], 0
    %19 = vsyncpa [#allocation11], 0
    loop: start=0, step=1, limit=4
    $region2: #{tpu_custom_call.1} parent=1 // loop_pre_header
      _
    $region3: #{tpu_custom_call.1} parent=1 // loop_header
      %s21 = sphi 0, %s25
      %p22 = scmp.ge.s32.totalorder %s21, 4
      %s28 = sphi 0, %s40
      %s29 = sphi 0, %s36
      %s30 = sphi 0, %s28
      %s31 = sphi 0, %s29
      %s32 = sphi 0, %s30
      %s33 = sphi 0, %s31
      %s45 = sphi 0, %s47
      %s48 = sphi 0, %s45
      %s49 = sphi 0, %s48
      %s65 = sphi 0, %s49
      %s71 = sphi 0, %s73
      %s74 = sphi 0, %s71
      %s75 = sphi 0, %s74
      %s91 = sphi 0, %s75
      %s95 = sphi 0, %s95
      %s97 = sphi 0, %s95
      %s98 = sphi 0, %s97
      %s112 = sphi 0, %s98
      %s116 = sphi 0, %s116
      %s118 = sphi 0, %s116
      %s119 = sphi 0, %s118
      %s133 = sphi 0, %s119
      %s137 = sphi 0, %s137
      %s139 = sphi 0, %s137
      %s140 = sphi 0, %s139
      %s154 = sphi 0, %s140
      %s160 = sphi 0, %s162
      %s163 = sphi 0, %s160
      %s164 = sphi 0, %s163
      %s180 = sphi 0, %s164
      %s186 = sphi 0, %s188
      %s189 = sphi 0, %s186
      %s190 = sphi 0, %s189
      %s206 = sphi 0, %s190
    $region4: #{tpu_custom_call.1} parent=1 // loop_header_branch
      %24 = sbr.rel (%p22) target = $region8
    $region5: #{tpu_custom_call.1} parent=1 // loop_body
      %s26 = ssub.s32 %s21, 1
      %s27 = ssub.s32 %s21, 2
      %s34 = sadd.s32 1, %s29
      %p35 = scmp.ge.s32.totalorder %s34, 2
      %s36 = scalar_select %p35, 0, %s34
      %s37 = sadd.s32 1, %s28
      %s38 = scalar_select %p35, %s37, %s28
      %p39 = scmp.ge.s32.totalorder %s38, 1
      %s40 = scalar_select %p39, 0, %s38
      %s41 = ssub.s32 %s28, %s40
      %s42 = ssub.s32 %s29, %s36
      %s43 = sor.u32 %s41, %s42
      %p44 = scmp.eq.s32.totalorder %s43, 0
      %s46 = sadd.s32 %s45, 1
      %s47 = scalar_select %p44, %s45, %s46
      %p50 = pneg %p44
      %p51 = scmp.eq.s32.totalorder %s21, 1
      %p52 = por %p50, %p51
      %p53 = scmp.ne.s32.totalorder %s45, %s48
      %p54 = scmp.eq.s32.totalorder %s21, 0
      %p55 = por %p53, %p54
      %p56 = scmp.ne.s32.totalorder %s45, %s48
      %p57 = scmp.eq.s32.totalorder %s26, 1
      %p58 = por %p56, %p57
      %p59 = scmp.ne.s32.totalorder %s48, %s49
      %p60 = scmp.eq.s32.totalorder %s26, 0
      %p61 = por %p59, %p60
      %p62 = scmp.ne.s32.totalorder %s48, %s49
      %p63 = scmp.eq.s32.totalorder %s27, 1
      %p64 = por %p62, %p63
      %p66 = scmp.ne.s32.totalorder %s49, %s65
      %p67 = scmp.eq.s32.totalorder %s27, 0
      %p68 = por %p66, %p67
      %s69 = ssub.s32 %s29, %s36
      %p70 = scmp.eq.s32.totalorder %s69, 0
      %s72 = sadd.s32 %s71, 1
      %s73 = scalar_select %p70, %s71, %s72
      %p76 = pneg %p70
      %p77 = scmp.eq.s32.totalorder %s21, 1
      %p78 = por %p76, %p77
      %p79 = scmp.ne.s32.totalorder %s71, %s74
      %p80 = scmp.eq.s32.totalorder %s21, 0
      %p81 = por %p79, %p80
      %p82 = scmp.ne.s32.totalorder %s71, %s74
      %p83 = scmp.eq.s32.totalorder %s26, 1
      %p84 = por %p82, %p83
      %p85 = scmp.ne.s32.totalorder %s74, %s75
      %p86 = scmp.eq.s32.totalorder %s26, 0
      %p87 = por %p85, %p86
      %p88 = scmp.ne.s32.totalorder %s74, %s75
      %p89 = scmp.eq.s32.totalorder %s27, 1
      %p90 = por %p88, %p89
      %p92 = scmp.ne.s32.totalorder %s75, %s91
      %p93 = scmp.eq.s32.totalorder %s27, 0
      %p94 = por %p92, %p93
      %s96 = sadd.s32 %s95, 1
      %p99 = scmp.eq.s32.totalorder %s21, 1
      %p100 = scmp.ne.s32.totalorder %s95, %s97
      %p101 = scmp.eq.s32.totalorder %s21, 0
      %p102 = por %p100, %p101
      %p103 = scmp.ne.s32.totalorder %s95, %s97
      %p104 = scmp.eq.s32.totalorder %s26, 1
      %p105 = por %p103, %p104
      %p106 = scmp.ne.s32.totalorder %s97, %s98
      %p107 = scmp.eq.s32.totalorder %s26, 0
      %p108 = por %p106, %p107
      %p109 = scmp.ne.s32.totalorder %s97, %s98
      %p110 = scmp.eq.s32.totalorder %s27, 1
      %p111 = por %p109, %p110
      %p113 = scmp.ne.s32.totalorder %s98, %s112
      %p114 = scmp.eq.s32.totalorder %s27, 0
      %p115 = por %p113, %p114
      %s117 = sadd.s32 %s116, 1
      %p120 = scmp.eq.s32.totalorder %s21, 1
      %p121 = scmp.ne.s32.totalorder %s116, %s118
      %p122 = scmp.eq.s32.totalorder %s21, 0
      %p123 = por %p121, %p122
      %p124 = scmp.ne.s32.totalorder %s116, %s118
      %p125 = scmp.eq.s32.totalorder %s26, 1
      %p126 = por %p124, %p125
      %p127 = scmp.ne.s32.totalorder %s118, %s119
      %p128 = scmp.eq.s32.totalorder %s26, 0
      %p129 = por %p127, %p128
      %p130 = scmp.ne.s32.totalorder %s118, %s119
      %p131 = scmp.eq.s32.totalorder %s27, 1
      %p132 = por %p130, %p131
      %p134 = scmp.ne.s32.totalorder %s119, %s133
      %p135 = scmp.eq.s32.totalorder %s27, 0
      %p136 = por %p134, %p135
      %s138 = sadd.s32 %s137, 1
      %p141 = scmp.eq.s32.totalorder %s21, 1
      %p142 = scmp.ne.s32.totalorder %s137, %s139
      %p143 = scmp.eq.s32.totalorder %s21, 0
      %p144 = por %p142, %p143
      %p145 = scmp.ne.s32.totalorder %s137, %s139
      %p146 = scmp.eq.s32.totalorder %s26, 1
      %p147 = por %p145, %p146
      %p148 = scmp.ne.s32.totalorder %s139, %s140
      %p149 = scmp.eq.s32.totalorder %s26, 0
      %p150 = por %p148, %p149
      %p151 = scmp.ne.s32.totalorder %s139, %s140
      %p152 = scmp.eq.s32.totalorder %s27, 1
      %p153 = por %p151, %p152
      %p155 = scmp.ne.s32.totalorder %s140, %s154
      %p156 = scmp.eq.s32.totalorder %s27, 0
      %p157 = por %p155, %p156
      %s158 = ssub.s32 %s28, %s40
      %p159 = scmp.eq.s32.totalorder %s158, 0
      %s161 = sadd.s32 %s160, 1
      %s162 = scalar_select %p159, %s160, %s161
      %p165 = pneg %p159
      %p166 = scmp.eq.s32.totalorder %s21, 1
      %p167 = por %p165, %p166
      %p168 = scmp.ne.s32.totalorder %s160, %s163
      %p169 = scmp.eq.s32.totalorder %s21, 0
      %p170 = por %p168, %p169
      %p171 = scmp.ne.s32.totalorder %s160, %s163
      %p172 = scmp.eq.s32.totalorder %s26, 1
      %p173 = por %p171, %p172
      %p174 = scmp.ne.s32.totalorder %s163, %s164
      %p175 = scmp.eq.s32.totalorder %s26, 0
      %p176 = por %p174, %p175
      %p177 = scmp.ne.s32.totalorder %s163, %s164
      %p178 = scmp.eq.s32.totalorder %s27, 1
      %p179 = por %p177, %p178
      %p181 = scmp.ne.s32.totalorder %s164, %s180
      %p182 = scmp.eq.s32.totalorder %s27, 0
      %p183 = por %p181, %p182
      %s184 = ssub.s32 %s28, %s40
      %p185 = scmp.eq.s32.totalorder %s184, 0
      %s187 = sadd.s32 %s186, 1
      %s188 = scalar_select %p185, %s186, %s187
      %p191 = pneg %p185
      %p192 = scmp.eq.s32.totalorder %s21, 1
      %p193 = por %p191, %p192
      %p194 = scmp.ne.s32.totalorder %s186, %s189
      %p195 = scmp.eq.s32.totalorder %s21, 0
      %p196 = por %p194, %p195
      %p197 = scmp.ne.s32.totalorder %s186, %s189
      %p198 = scmp.eq.s32.totalorder %s26, 1
      %p199 = por %p197, %p198
      %p200 = scmp.ne.s32.totalorder %s189, %s190
      %p201 = scmp.eq.s32.totalorder %s26, 0
      %p202 = por %p200, %p201
      %p203 = scmp.ne.s32.totalorder %s189, %s190
      %p204 = scmp.eq.s32.totalorder %s27, 1
      %p205 = por %p203, %p204
      %p207 = scmp.ne.s32.totalorder %s190, %s206
      %p208 = scmp.eq.s32.totalorder %s27, 0
      %p209 = por %p207, %p208
      %p210 = scmp.le.s32.totalorder 1, %s21
      %p211 = scmp.lt.s32.totalorder %s21, 3
      %p212 = pnand %p210, %p211
      %p213 = pneg %p212
      // Predicated region
      $region9: #{tpu_custom_call.1} parent=5 // pred_check
        _
      $region10: #{tpu_custom_call.1} parent=5 // pred_check_branch
        %215 = sbr.rel (%p212) target = $region12
      $region11: #{tpu_custom_call.1} parent=5 // pred_region
        %s216 = ssub.s32 %s21, 1
        // Predicated region
        $region13: #{tpu_custom_call.1} parent=11 // pred_check
          %p217 = pneg %p108
        $region14: #{tpu_custom_call.1} parent=11 // pred_check_branch
          %219 = sbr.rel (%p217) target = $region16
        $region15: #{tpu_custom_call.1} parent=11 // pred_region
          _
        $region16: #{tpu_custom_call.1} parent=11 // pred_fallthru
          _
        // Predicated region
        $region17: #{tpu_custom_call.1} parent=11 // pred_check
          %p220 = pneg %p129
        $region18: #{tpu_custom_call.1} parent=11 // pred_check_branch
          %222 = sbr.rel (%p220) target = $region20
        $region19: #{tpu_custom_call.1} parent=11 // pred_region
          %s224 = ssub.s32 1024, 1024
          %225 = vsyncadd [#allocation7], %s224
          %s226 = sshll.u32 [#allocation8], 4
          %s227 = int_to_ptr.vmem [resolvable:$true] %s226
          %232 = dma.hbm_to_vmem [thread:$0]  %s3, 1024, %s227, [#allocation7], 64, 64, 4
        $region20: #{tpu_custom_call.1} parent=11 // pred_fallthru
          _
        // Predicated region
        $region21: #{tpu_custom_call.1} parent=11 // pred_check
          %p233 = pneg %p150
        $region22: #{tpu_custom_call.1} parent=11 // pred_check_branch
          %235 = sbr.rel (%p233) target = $region24
        $region23: #{tpu_custom_call.1} parent=11 // pred_region
          _
        $region24: #{tpu_custom_call.1} parent=11 // pred_fallthru
          _
      $region12: #{tpu_custom_call.1} parent=5 // pred_fallthru
        _
      %p236 = scmp.lt.s32.totalorder %s21, 2
      // Predicated region
      $region25: #{tpu_custom_call.1} parent=5 // pred_check
        %p237 = pneg %p236
      $region26: #{tpu_custom_call.1} parent=5 // pred_check_branch
        %239 = sbr.rel (%p237) target = $region28
      $region27: #{tpu_custom_call.1} parent=5 // pred_region
        // Predicated region
        $region29: #{tpu_custom_call.1} parent=27 // pred_check
          %p240 = pneg %p55
        $region30: #{tpu_custom_call.1} parent=27 // pred_check_branch
          %242 = sbr.rel (%p240) target = $region32
        $region31: #{tpu_custom_call.1} parent=27 // pred_region
          %s243 = sand.u32 %s45, 1
          %s244 = scalar_lea.sflag [#allocation4], %s243
          %s245 = sand.u32 %s45, 1
          %s246 = smul.addr %s245, 32
          %s247 = scalar_lea.vmem [#allocation3], %s246
          %s248 = smul.u32 4, %s29
          %s250 = ssub.s32 512, 512
          %251 = vsyncadd %s244, %s250
          %s252 = smul.addr %s28, 8
          %s253 = sadd.s32 %s248, %s252
          %s254 = smul.addr %s253, 128
          %s255 = scalar_lea.hbm %s0, %s254
          %s257 = sshll.u32 %s247, 4
          %s258 = int_to_ptr.vmem [resolvable:$true] %s257
          %260 = dma.hbm_to_vmem [thread:$0]  %s255, 512, %s258, %s244
        $region32: #{tpu_custom_call.1} parent=27 // pred_fallthru
          _
        // Predicated region
        $region33: #{tpu_custom_call.1} parent=27 // pred_check
          %p261 = pneg %p81
        $region34: #{tpu_custom_call.1} parent=27 // pred_check_branch
          %263 = sbr.rel (%p261) target = $region36
        $region35: #{tpu_custom_call.1} parent=27 // pred_region
          %s264 = sand.u32 %s21, 1
          %s265 = scalar_lea.sflag [#allocation7], %s264
          %s266 = sand.u32 %s71, 1
          %s267 = smul.addr %s266, 512
          %s268 = scalar_lea.vmem [#allocation6], %s267
          %s269 = smul.u32 64, %s29
          %s271 = ssub.s32 8192, 8192
          %272 = vsyncadd %s265, %s271
          %s273 = smul.addr %s269, 2
          %s274 = smul.addr %s273, 64
          %s275 = scalar_lea.hbm %s1, %s274
          %s276 = sshll.u32 %s268, 4
          %s277 = int_to_ptr.vmem [resolvable:$true] %s276
          %282 = dma.hbm_to_vmem [thread:$0]  %s275, 8192, %s277, %s265, 128, 128, 8
        $region36: #{tpu_custom_call.1} parent=27 // pred_fallthru
          _
      $region28: #{tpu_custom_call.1} parent=5 // pred_fallthru
        _
      %p283 = scmp.le.s32.totalorder 1, %s21
      %p284 = scmp.lt.s32.totalorder %s21, 3
      %p285 = pnand %p283, %p284
      %p286 = pneg %p285
      // Predicated region
      $region37: #{tpu_custom_call.1} parent=5 // pred_check
        _
      $region38: #{tpu_custom_call.1} parent=5 // pred_check_branch
        %288 = sbr.rel (%p285) target = $region40
      $region39: #{tpu_custom_call.1} parent=5 // pred_region
        %s289 = ssub.s32 %s21, 1
        %s290 = sand.u32 %s48, 1
        %s291 = scalar_lea.sflag [#allocation4], %s290
        %s292 = sand.u32 %s48, 1
        %s293 = smul.addr %s292, 32
        %s294 = scalar_lea.vmem [#allocation3], %s293
        // Predicated region
        $region41: #{tpu_custom_call.1} parent=39 // pred_check
          %p295 = pneg %p61
        $region42: #{tpu_custom_call.1} parent=39 // pred_check_branch
          %297 = sbr.rel (%p295) target = $region44
        $region43: #{tpu_custom_call.1} parent=39 // pred_region
          %298 = dma.done %s291, 512
        $region44: #{tpu_custom_call.1} parent=39 // pred_fallthru
          _
        %s299 = sand.u32 %s26, 1
        %s300 = scalar_lea.sflag [#allocation7], %s299
        %s301 = sand.u32 %s74, 1
        %s302 = smul.addr %s301, 512
        %s303 = scalar_lea.vmem [#allocation6], %s302
        // Predicated region
        $region45: #{tpu_custom_call.1} parent=39 // pred_check
          %p304 = pneg %p87
        $region46: #{tpu_custom_call.1} parent=39 // pred_check_branch
          %306 = sbr.rel (%p304) target = $region48
        $region47: #{tpu_custom_call.1} parent=39 // pred_region
          %307 = dma.done %s300, 8192
        $region48: #{tpu_custom_call.1} parent=39 // pred_fallthru
          _
        // Predicated region
        $region49: #{tpu_custom_call.1} parent=39 // pred_check
          %p308 = pneg %p129
        $region50: #{tpu_custom_call.1} parent=39 // pred_check_branch
          %310 = sbr.rel (%p308) target = $region52
        $region51: #{tpu_custom_call.1} parent=39 // pred_region
          %311 = dma.done [#allocation7], 1024
        $region52: #{tpu_custom_call.1} parent=39 // pred_fallthru
          _
        %s312 = sand.u32 %s48, 1
        %s313 = scalar_lea.sflag [#allocation4], %s312
        %s314 = sand.u32 %s48, 1
        %s315 = smul.addr %s314, 32
        %s316 = scalar_lea.vmem [#allocation3], %s315
        %p317 = pneg %p61
        %p318 = pneg %p58
        %s319 = sand.u32 %s26, 1
        %s320 = scalar_lea.sflag [#allocation7], %s319
        %s321 = sand.u32 %s74, 1
        %s322 = smul.addr %s321, 512
        %s323 = scalar_lea.vmem [#allocation6], %s322
        %p324 = pneg %p87
        %p325 = pneg %p84
        %p326 = pneg %p108
        %p327 = pneg %p105
        %p328 = pneg %p129
        %p329 = pneg %p126
        %p330 = pneg %p150
        %p331 = pneg %p147
        %p332 = pneg %p176
        %p333 = pneg %p173
        %p334 = pneg %p202
        %p335 = pneg %p199
        %s336 = smul.u32 4, %s31
        %s337 = smul.u32 64, %s31
        %p339 = scmp.eq.s32.totalorder %s31, 0
        // Predicated region
        $region53: #{tpu_custom_call.1} parent=39 // pred_check
          %p340 = pneg %p339
        $region54: #{tpu_custom_call.1} parent=39 // pred_check_branch
          %342 = sbr.rel (%p340) target = $region56
        $region55: #{tpu_custom_call.1} parent=39 // pred_region
          %343 = vst [vmem:[#allocation2] sm:$0xff] 0.0
          %344 = vst [vmem:[#allocation2 + $0x8] sm:$0xff] 0.0
        $region56: #{tpu_custom_call.1} parent=39 // pred_fallthru
          _
        %v345 = vld [vmem:[#allocation2] sm:$0xff]
        %v346 = vld [vmem:[#allocation2 + $0x8] sm:$0xff]
        %v347 = vld [vmem:[%s294] sm:$0xff]
        %v348 = vld [vmem:[%s294 + $0x8] sm:$0xff]
        %v349 = vld [vmem:[%s294 + $0x10] sm:$0xff]
        %v350 = vld [vmem:[%s294 + $0x18] sm:$0xff]
        %v351 = vpack.c.bf16 %v347, %v347
        %v352 = vpack.c.bf16 %v348, %v348
        %v353 = vpack.c.bf16 %v349, %v349
        %v354 = vpack.c.bf16 %v350, %v350
        %v355 = vld [vmem:[%s303] sm:$0xff]
        %v356 = vld [vmem:[%s303 + $0x8] sm:$0xff]
        %v357 = vld [vmem:[%s303 + $0x10] sm:$0xff]
        %v358 = vld [vmem:[%s303 + $0x18] sm:$0xff]
        %v359 = vld [vmem:[%s303 + $0x20] sm:$0xff]
        %v360 = vld [vmem:[%s303 + $0x28] sm:$0xff]
        %v361 = vld [vmem:[%s303 + $0x30] sm:$0xff]
        %v362 = vld [vmem:[%s303 + $0x38] sm:$0xff]
        %v363 = vld [vmem:[%s303 + $0x40] sm:$0xff]
        %v364 = vld [vmem:[%s303 + $0x48] sm:$0xff]
        %v365 = vld [vmem:[%s303 + $0x50] sm:$0xff]
        %v366 = vld [vmem:[%s303 + $0x58] sm:$0xff]
        %v367 = vld [vmem:[%s303 + $0x60] sm:$0xff]
        %v368 = vld [vmem:[%s303 + $0x68] sm:$0xff]
        %v369 = vld [vmem:[%s303 + $0x70] sm:$0xff]
        %v370 = vld [vmem:[%s303 + $0x78] sm:$0xff]
        %v371 = vld [vmem:[%s303 + $0x80] sm:$0xff]
        %v372 = vld [vmem:[%s303 + $0x88] sm:$0xff]
        %v373 = vld [vmem:[%s303 + $0x90] sm:$0xff]
        %v374 = vld [vmem:[%s303 + $0x98] sm:$0xff]
        %v375 = vld [vmem:[%s303 + $0xa0] sm:$0xff]
        %v376 = vld [vmem:[%s303 + $0xa8] sm:$0xff]
        %v377 = vld [vmem:[%s303 + $0xb0] sm:$0xff]
        %v378 = vld [vmem:[%s303 + $0xb8] sm:$0xff]
        %v379 = vld [vmem:[%s303 + $0xc0] sm:$0xff]
        %v380 = vld [vmem:[%s303 + $0xc8] sm:$0xff]
        %v381 = vld [vmem:[%s303 + $0xd0] sm:$0xff]
        %v382 = vld [vmem:[%s303 + $0xd8] sm:$0xff]
        %v383 = vld [vmem:[%s303 + $0xe0] sm:$0xff]
        %v384 = vld [vmem:[%s303 + $0xe8] sm:$0xff]
        %v385 = vld [vmem:[%s303 + $0xf0] sm:$0xff]
        %v386 = vld [vmem:[%s303 + $0xf8] sm:$0xff]
        %v387 = vld [vmem:[%s303 + $0x100] sm:$0xff]
        %v388 = vld [vmem:[%s303 + $0x108] sm:$0xff]
        %v389 = vld [vmem:[%s303 + $0x110] sm:$0xff]
        %v390 = vld [vmem:[%s303 + $0x118] sm:$0xff]
        %v391 = vld [vmem:[%s303 + $0x120] sm:$0xff]
        %v392 = vld [vmem:[%s303 + $0x128] sm:$0xff]
        %v393 = vld [vmem:[%s303 + $0x130] sm:$0xff]
        %v394 = vld [vmem:[%s303 + $0x138] sm:$0xff]
        %v395 = vld [vmem:[%s303 + $0x140] sm:$0xff]
        %v396 = vld [vmem:[%s303 + $0x148] sm:$0xff]
        %v397 = vld [vmem:[%s303 + $0x150] sm:$0xff]
        %v398 = vld [vmem:[%s303 + $0x158] sm:$0xff]
        %v399 = vld [vmem:[%s303 + $0x160] sm:$0xff]
        %v400 = vld [vmem:[%s303 + $0x168] sm:$0xff]
        %v401 = vld [vmem:[%s303 + $0x170] sm:$0xff]
        %v402 = vld [vmem:[%s303 + $0x178] sm:$0xff]
        %v403 = vld [vmem:[%s303 + $0x180] sm:$0xff]
        %v404 = vld [vmem:[%s303 + $0x188] sm:$0xff]
        %v405 = vld [vmem:[%s303 + $0x190] sm:$0xff]
        %v406 = vld [vmem:[%s303 + $0x198] sm:$0xff]
        %v407 = vld [vmem:[%s303 + $0x1a0] sm:$0xff]
        %v408 = vld [vmem:[%s303 + $0x1a8] sm:$0xff]
        %v409 = vld [vmem:[%s303 + $0x1b0] sm:$0xff]
        %v410 = vld [vmem:[%s303 + $0x1b8] sm:$0xff]
        %v411 = vld [vmem:[%s303 + $0x1c0] sm:$0xff]
        %v412 = vld [vmem:[%s303 + $0x1c8] sm:$0xff]
        %v413 = vld [vmem:[%s303 + $0x1d0] sm:$0xff]
        %v414 = vld [vmem:[%s303 + $0x1d8] sm:$0xff]
        %v415 = vld [vmem:[%s303 + $0x1e0] sm:$0xff]
        %v416 = vld [vmem:[%s303 + $0x1e8] sm:$0xff]
        %v417 = vld [vmem:[%s303 + $0x1f0] sm:$0xff]
        %v418 = vld [vmem:[%s303 + $0x1f8] sm:$0xff]
        %v483 = vunpack.c.l.b16 %v355
        %v484 = vunpack.c.h.b16 %v355
        %v485 = vunpack.c.l.b16 %v356
        %v486 = vunpack.c.h.b16 %v356
        %v487 = vunpack.c.l.b16 %v357
        %v488 = vunpack.c.h.b16 %v357
        %v489 = vunpack.c.l.b16 %v358
        %v490 = vunpack.c.h.b16 %v358
        %v491 = vunpack.c.l.b16 %v359
        %v492 = vunpack.c.h.b16 %v359
        %v493 = vunpack.c.l.b16 %v360
        %v494 = vunpack.c.h.b16 %v360
        %v495 = vunpack.c.l.b16 %v361
        %v496 = vunpack.c.h.b16 %v361
        %v497 = vunpack.c.l.b16 %v362
        %v498 = vunpack.c.h.b16 %v362
        %v499 = vunpack.c.l.b16 %v363
        %v500 = vunpack.c.h.b16 %v363
        %v501 = vunpack.c.l.b16 %v364
        %v502 = vunpack.c.h.b16 %v364
        %v503 = vunpack.c.l.b16 %v365
        %v504 = vunpack.c.h.b16 %v365
        %v505 = vunpack.c.l.b16 %v366
        %v506 = vunpack.c.h.b16 %v366
        %v507 = vunpack.c.l.b16 %v367
        %v508 = vunpack.c.h.b16 %v367
        %v509 = vunpack.c.l.b16 %v368
        %v510 = vunpack.c.h.b16 %v368
        %v511 = vunpack.c.l.b16 %v369
        %v512 = vunpack.c.h.b16 %v369
        %v513 = vunpack.c.l.b16 %v370
        %v514 = vunpack.c.h.b16 %v370
        %v515 = vunpack.c.l.b16 %v371
        %v516 = vunpack.c.h.b16 %v371
        %v517 = vunpack.c.l.b16 %v372
        %v518 = vunpack.c.h.b16 %v372
        %v519 = vunpack.c.l.b16 %v373
        %v520 = vunpack.c.h.b16 %v373
        %v521 = vunpack.c.l.b16 %v374
        %v522 = vunpack.c.h.b16 %v374
        %v523 = vunpack.c.l.b16 %v375
        %v524 = vunpack.c.h.b16 %v375
        %v525 = vunpack.c.l.b16 %v376
        %v526 = vunpack.c.h.b16 %v376
        %v527 = vunpack.c.l.b16 %v377
        %v528 = vunpack.c.h.b16 %v377
        %v529 = vunpack.c.l.b16 %v378
        %v530 = vunpack.c.h.b16 %v378
        %v531 = vunpack.c.l.b16 %v379
        %v532 = vunpack.c.h.b16 %v379
        %v533 = vunpack.c.l.b16 %v380
        %v534 = vunpack.c.h.b16 %v380
        %v535 = vunpack.c.l.b16 %v381
        %v536 = vunpack.c.h.b16 %v381
        %v537 = vunpack.c.l.b16 %v382
        %v538 = vunpack.c.h.b16 %v382
        %v539 = vunpack.c.l.b16 %v383
        %v540 = vunpack.c.h.b16 %v383
        %v541 = vunpack.c.l.b16 %v384
        %v542 = vunpack.c.h.b16 %v384
        %v543 = vunpack.c.l.b16 %v385
        %v544 = vunpack.c.h.b16 %v385
        %v545 = vunpack.c.l.b16 %v386
        %v546 = vunpack.c.h.b16 %v386
        %v547 = vunpack.c.l.b16 %v387
        %v548 = vunpack.c.h.b16 %v387
        %v549 = vunpack.c.l.b16 %v388
        %v550 = vunpack.c.h.b16 %v388
        %v551 = vunpack.c.l.b16 %v389
        %v552 = vunpack.c.h.b16 %v389
        %v553 = vunpack.c.l.b16 %v390
        %v554 = vunpack.c.h.b16 %v390
        %v555 = vunpack.c.l.b16 %v391
        %v556 = vunpack.c.h.b16 %v391
        %v557 = vunpack.c.l.b16 %v392
        %v558 = vunpack.c.h.b16 %v392
        %v559 = vunpack.c.l.b16 %v393
        %v560 = vunpack.c.h.b16 %v393
        %v561 = vunpack.c.l.b16 %v394
        %v562 = vunpack.c.h.b16 %v394
        %v563 = vunpack.c.l.b16 %v395
        %v564 = vunpack.c.h.b16 %v395
        %v565 = vunpack.c.l.b16 %v396
        %v566 = vunpack.c.h.b16 %v396
        %v567 = vunpack.c.l.b16 %v397
        %v568 = vunpack.c.h.b16 %v397
        %v569 = vunpack.c.l.b16 %v398
        %v570 = vunpack.c.h.b16 %v398
        %v571 = vunpack.c.l.b16 %v399
        %v572 = vunpack.c.h.b16 %v399
        %v573 = vunpack.c.l.b16 %v400
        %v574 = vunpack.c.h.b16 %v400
        %v575 = vunpack.c.l.b16 %v401
        %v576 = vunpack.c.h.b16 %v401
        %v577 = vunpack.c.l.b16 %v402
        %v578 = vunpack.c.h.b16 %v402
        %v579 = vunpack.c.l.b16 %v403
        %v580 = vunpack.c.h.b16 %v403
        %v581 = vunpack.c.l.b16 %v404
        %v582 = vunpack.c.h.b16 %v404
        %v583 = vunpack.c.l.b16 %v405
        %v584 = vunpack.c.h.b16 %v405
        %v585 = vunpack.c.l.b16 %v406
        %v586 = vunpack.c.h.b16 %v406
        %v587 = vunpack.c.l.b16 %v407
        %v588 = vunpack.c.h.b16 %v407
        %v589 = vunpack.c.l.b16 %v408
        %v590 = vunpack.c.h.b16 %v408
        %v591 = vunpack.c.l.b16 %v409
        %v592 = vunpack.c.h.b16 %v409
        %v593 = vunpack.c.l.b16 %v410
        %v594 = vunpack.c.h.b16 %v410
        %v595 = vunpack.c.l.b16 %v411
        %v596 = vunpack.c.h.b16 %v411
        %v597 = vunpack.c.l.b16 %v412
        %v598 = vunpack.c.h.b16 %v412
        %v599 = vunpack.c.l.b16 %v413
        %v600 = vunpack.c.h.b16 %v413
        %v601 = vunpack.c.l.b16 %v414
        %v602 = vunpack.c.h.b16 %v414
        %v603 = vunpack.c.l.b16 %v415
        %v604 = vunpack.c.h.b16 %v415
        %v605 = vunpack.c.l.b16 %v416
        %v606 = vunpack.c.h.b16 %v416
        %v607 = vunpack.c.l.b16 %v417
        %v608 = vunpack.c.h.b16 %v417
        %v609 = vunpack.c.l.b16 %v418
        %v610 = vunpack.c.h.b16 %v418
        %v611 = vpack.c.b16 %v485, %v483
        %v612 = vpack.c.b16 %v486, %v484
        %v613 = vpack.c.b16 %v489, %v487
        %v614 = vpack.c.b16 %v490, %v488
        %v615 = vpack.c.b16 %v493, %v491
        %v616 = vpack.c.b16 %v494, %v492
        %v617 = vpack.c.b16 %v497, %v495
        %v618 = vpack.c.b16 %v498, %v496
        %v619 = vpack.c.b16 %v501, %v499
        %v620 = vpack.c.b16 %v502, %v500
        %v621 = vpack.c.b16 %v505, %v503
        %v622 = vpack.c.b16 %v506, %v504
        %v623 = vpack.c.b16 %v509, %v507
        %v624 = vpack.c.b16 %v510, %v508
        %v625 = vpack.c.b16 %v513, %v511
        %v626 = vpack.c.b16 %v514, %v512
        %v627 = vpack.c.b16 %v517, %v515
        %v628 = vpack.c.b16 %v518, %v516
        %v629 = vpack.c.b16 %v521, %v519
        %v630 = vpack.c.b16 %v522, %v520
        %v631 = vpack.c.b16 %v525, %v523
        %v632 = vpack.c.b16 %v526, %v524
        %v633 = vpack.c.b16 %v529, %v527
        %v634 = vpack.c.b16 %v530, %v528
        %v635 = vpack.c.b16 %v533, %v531
        %v636 = vpack.c.b16 %v534, %v532
        %v637 = vpack.c.b16 %v537, %v535
        %v638 = vpack.c.b16 %v538, %v536
        %v639 = vpack.c.b16 %v541, %v539
        %v640 = vpack.c.b16 %v542, %v540
        %v641 = vpack.c.b16 %v545, %v543
        %v642 = vpack.c.b16 %v546, %v544
        %v643 = vpack.c.b16 %v549, %v547
        %v644 = vpack.c.b16 %v550, %v548
        %v645 = vpack.c.b16 %v553, %v551
        %v646 = vpack.c.b16 %v554, %v552
        %v647 = vpack.c.b16 %v557, %v555
        %v648 = vpack.c.b16 %v558, %v556
        %v649 = vpack.c.b16 %v561, %v559
        %v650 = vpack.c.b16 %v562, %v560
        %v651 = vpack.c.b16 %v565, %v563
        %v652 = vpack.c.b16 %v566, %v564
        %v653 = vpack.c.b16 %v569, %v567
        %v654 = vpack.c.b16 %v570, %v568
        %v655 = vpack.c.b16 %v573, %v571
        %v656 = vpack.c.b16 %v574, %v572
        %v657 = vpack.c.b16 %v577, %v575
        %v658 = vpack.c.b16 %v578, %v576
        %v659 = vpack.c.b16 %v581, %v579
        %v660 = vpack.c.b16 %v582, %v580
        %v661 = vpack.c.b16 %v585, %v583
        %v662 = vpack.c.b16 %v586, %v584
        %v663 = vpack.c.b16 %v589, %v587
        %v664 = vpack.c.b16 %v590, %v588
        %v665 = vpack.c.b16 %v593, %v591
        %v666 = vpack.c.b16 %v594, %v592
        %v667 = vpack.c.b16 %v597, %v595
        %v668 = vpack.c.b16 %v598, %v596
        %v669 = vpack.c.b16 %v601, %v599
        %v670 = vpack.c.b16 %v602, %v600
        %v671 = vpack.c.b16 %v605, %v603
        %v672 = vpack.c.b16 %v606, %v604
        %v673 = vpack.c.b16 %v609, %v607
        %v674 = vpack.c.b16 %v610, %v608
        %739 = vmatprep.subr.bf16.mxu0 %v612
        %740 = vmatpush1.bf16.msra.mxu0 %v611
        %741 = vmatprep.subr.bf16.mxu0 %v614
        %742 = vmatpush1.bf16.msra.mxu0 %v613
        %743 = vmatprep.subr.bf16.mxu0 %v616
        %744 = vmatpush1.bf16.msra.mxu0 %v615
        %745 = vmatprep.subr.bf16.mxu0 %v618
        %746 = vmatpush1.bf16.msra.mxu0 %v617
        %747 = vmatprep.subr.bf16.mxu0 %v620
        %748 = vmatpush1.bf16.msra.mxu0 %v619
        %749 = vmatprep.subr.bf16.mxu0 %v622
        %750 = vmatpush1.bf16.msra.mxu0 %v621
        %751 = vmatprep.subr.bf16.mxu0 %v624
        %752 = vmatpush1.bf16.msra.mxu0 %v623
        %753 = vmatprep.subr.bf16.mxu0 %v626
        %754 = vmatpush1.bf16.msra.mxu0 %v625
        %755 = vmatprep.subr.bf16.mxu0 %v628
        %756 = vmatpush1.bf16.msra.mxu0 %v627
        %757 = vmatprep.subr.bf16.mxu0 %v630
        %758 = vmatpush1.bf16.msra.mxu0 %v629
        %759 = vmatprep.subr.bf16.mxu0 %v632
        %760 = vmatpush1.bf16.msra.mxu0 %v631
        %761 = vmatprep.subr.bf16.mxu0 %v634
        %762 = vmatpush1.bf16.msra.mxu0 %v633
        %763 = vmatprep.subr.bf16.mxu0 %v636
        %764 = vmatpush1.bf16.msra.mxu0 %v635
        %765 = vmatprep.subr.bf16.mxu0 %v638
        %766 = vmatpush1.bf16.msra.mxu0 %v637
        %767 = vmatprep.subr.bf16.mxu0 %v640
        %768 = vmatpush1.bf16.msra.mxu0 %v639
        %769 = vmatprep.subr.bf16.mxu0 %v642
        %770 = vmatpush1.bf16.msra.mxu0 %v641
        %771 = vmatprep.mubr.bf16.mxu0 %v352
        %772 = vmatmul.mubr.bf16.gmra.mrb[0].mxu0 %v351
        %v773 = vpop.f32.mrb[0].mxu0
        %v774 = vadd.f32 0.0, %v773
        %v775 = vpop.f32.mrb[0].mxu0
        %v776 = vadd.f32 0.0, %v775
        %v777 = vpop.f32.mrb[0].mxu0
        %v778 = vpop.f32.mrb[0].mxu0
        %779 = vdwg.mxu0
        %780 = vmatprep.subr.bf16.mxu0 %v644
        %781 = vmatpush1.bf16.msra.mxu0 %v643
        %782 = vmatprep.subr.bf16.mxu0 %v646
        %783 = vmatpush1.bf16.msra.mxu0 %v645
        %784 = vmatprep.subr.bf16.mxu0 %v648
        %785 = vmatpush1.bf16.msra.mxu0 %v647
        %786 = vmatprep.subr.bf16.mxu0 %v650
        %787 = vmatpush1.bf16.msra.mxu0 %v649
        %788 = vmatprep.subr.bf16.mxu0 %v652
        %789 = vmatpush1.bf16.msra.mxu0 %v651
        %790 = vmatprep.subr.bf16.mxu0 %v654
        %791 = vmatpush1.bf16.msra.mxu0 %v653
        %792 = vmatprep.subr.bf16.mxu0 %v656
        %793 = vmatpush1.bf16.msra.mxu0 %v655
        %794 = vmatprep.subr.bf16.mxu0 %v658
        %795 = vmatpush1.bf16.msra.mxu0 %v657
        %796 = vmatprep.subr.bf16.mxu0 %v660
        %797 = vmatpush1.bf16.msra.mxu0 %v659
        %798 = vmatprep.subr.bf16.mxu0 %v662
        %799 = vmatpush1.bf16.msra.mxu0 %v661
        %800 = vmatprep.subr.bf16.mxu0 %v664
        %801 = vmatpush1.bf16.msra.mxu0 %v663
        %802 = vmatprep.subr.bf16.mxu0 %v666
        %803 = vmatpush1.bf16.msra.mxu0 %v665
        %804 = vmatprep.subr.bf16.mxu0 %v668
        %805 = vmatpush1.bf16.msra.mxu0 %v667
        %806 = vmatprep.subr.bf16.mxu0 %v670
        %807 = vmatpush1.bf16.msra.mxu0 %v669
        %808 = vmatprep.subr.bf16.mxu0 %v672
        %809 = vmatpush1.bf16.msra.mxu0 %v671
        %810 = vmatprep.subr.bf16.mxu0 %v674
        %811 = vmatpush1.bf16.msra.mxu0 %v673
        %812 = vmatprep.mubr.bf16.mxu0 %v354
        %813 = vmatmul.mubr.bf16.gmra.mrb[0].mxu0 %v353
        %v814 = vpop.f32.mrb[0].mxu0
        %v815 = vadd.f32 %v774, %v814
        %v816 = vpop.f32.mrb[0].mxu0
        %v817 = vadd.f32 %v776, %v816
        %v818 = vpop.f32.mrb[0].mxu0
        %v819 = vpop.f32.mrb[0].mxu0
        %820 = vdwg.mxu0
        %v821 = vadd.f32 %v345, %v815
        %v822 = vadd.f32 %v346, %v817
        %823 = vst [vmem:[#allocation2] sm:$0xff] %v821
        %824 = vst [vmem:[#allocation2 + $0x8] sm:$0xff] %v822
        %p825 = scmp.eq.s32.totalorder %s31, 1
        // Predicated region
        $region57: #{tpu_custom_call.1} parent=39 // pred_check
          %p826 = pneg %p825
        $region58: #{tpu_custom_call.1} parent=39 // pred_check_branch
          %828 = sbr.rel (%p826) target = $region60
        $region59: #{tpu_custom_call.1} parent=39 // pred_region
          %v829 = vld [vmem:[#allocation2] sm:$0xff]
          %v830 = vld [vmem:[#allocation2 + $0x8] sm:$0xff]
          %v831 = vld [vmem:[%s2] sm:$0x3]
          %v833 = vlaneseq
          %v834 = vshrl.u32 %v833, 7
          %v835 = vsub.s32 0, %v834
          %v836 = vrot.slane %v831, %v835
          %v837 = vlaneseq
          %v838 = vshrl.u32 %v837, 7
          %v839 = vsub.s32 1, %v838
          %v840 = vrot.slane %v831, %v839
          %v843 = vadd.f32 %v829, %v836
          %v844 = vadd.f32 %v830, %v840
          %v845 = vmax.f32 %v843, 0.0
          %v846 = vmax.f32 %v844, 0.0
          %847 = vst [vmem:[#allocation9] sm:$0xff] %v845
          %848 = vst [vmem:[#allocation9 + $0x8] sm:$0xff] %v846
          %v849 = vpack.c.bf16 %v846, %v845
          %v850 = vld [vmem:[#allocation8] sm:$0xf]
          %v851 = vld [vmem:[#allocation8 + $0x4] sm:$0xf]
          %v852 = vld [vmem:[#allocation8 + $0x8] sm:$0xf]
          %v853 = vld [vmem:[#allocation8 + $0xc] sm:$0xf]
          %v854 = vld [vmem:[#allocation8 + $0x10] sm:$0xf]
          %v855 = vld [vmem:[#allocation8 + $0x14] sm:$0xf]
          %v856 = vld [vmem:[#allocation8 + $0x18] sm:$0xf]
          %v857 = vld [vmem:[#allocation8 + $0x1c] sm:$0xf]
          %v858 = vld [vmem:[#allocation8 + $0x20] sm:$0xf]
          %v859 = vld [vmem:[#allocation8 + $0x24] sm:$0xf]
          %v860 = vld [vmem:[#allocation8 + $0x28] sm:$0xf]
          %v861 = vld [vmem:[#allocation8 + $0x2c] sm:$0xf]
          %v862 = vld [vmem:[#allocation8 + $0x30] sm:$0xf]
          %v863 = vld [vmem:[#allocation8 + $0x34] sm:$0xf]
          %v864 = vld [vmem:[#allocation8 + $0x38] sm:$0xf]
          %v865 = vld [vmem:[#allocation8 + $0x3c] sm:$0xf]
          %v866 = vld [vmem:[%s4] sm:$0x1]
          %v868 = vlaneseq
          %v869 = vshrl.u32 %v868, 7
          %v870 = vsub.s32 0, %v869
          %v871 = vrot.slane %v866, %v870
          %v889 = vunpack.c.l.b16 %v850
          %v890 = vunpack.c.l.b16 %v851
          %v891 = vunpack.c.l.b16 %v852
          %v892 = vunpack.c.l.b16 %v853
          %v893 = vunpack.c.l.b16 %v854
          %v894 = vunpack.c.l.b16 %v855
          %v895 = vunpack.c.l.b16 %v856
          %v896 = vunpack.c.l.b16 %v857
          %v897 = vunpack.c.l.b16 %v858
          %v898 = vunpack.c.l.b16 %v859
          %v899 = vunpack.c.l.b16 %v860
          %v900 = vunpack.c.l.b16 %v861
          %v901 = vunpack.c.l.b16 %v862
          %v902 = vunpack.c.l.b16 %v863
          %v903 = vunpack.c.l.b16 %v864
          %v904 = vunpack.c.l.b16 %v865
          %v905 = vpack.c.b16 %v890, %v889
          %v906 = vpack.c.b16 %v892, %v891
          %v907 = vpack.c.b16 %v894, %v893
          %v908 = vpack.c.b16 %v896, %v895
          %v909 = vpack.c.b16 %v898, %v897
          %v910 = vpack.c.b16 %v900, %v899
          %v911 = vpack.c.b16 %v902, %v901
          %v912 = vpack.c.b16 %v904, %v903
          %921 = vmatprep.subr.bf16.mxu0 0
          %922 = vmatpush1.bf16.msra.mxu0 %v905
          %923 = vmatprep.subr.bf16.mxu0 0
          %924 = vmatpush1.bf16.msra.mxu0 %v906
          %925 = vmatprep.subr.bf16.mxu0 0
          %926 = vmatpush1.bf16.msra.mxu0 %v907
          %927 = vmatprep.subr.bf16.mxu0 0
          %928 = vmatpush1.bf16.msra.mxu0 %v908
          %929 = vmatprep.subr.bf16.mxu0 0
          %930 = vmatpush1.bf16.msra.mxu0 %v909
          %931 = vmatprep.subr.bf16.mxu0 0
          %932 = vmatpush1.bf16.msra.mxu0 %v910
          %933 = vmatprep.subr.bf16.mxu0 0
          %934 = vmatpush1.bf16.msra.mxu0 %v911
          %935 = vmatprep.subr.bf16.mxu0 0
          %936 = vmatpush1.bf16.msra.mxu0 %v912
          %937 = vmatprep.subr.bf16.mxu0 0
          %938 = vmatpush1.bf16.msra.mxu0 0
          %939 = vmatprep.subr.bf16.mxu0 0
          %940 = vmatpush1.bf16.msra.mxu0 0
          %941 = vmatprep.subr.bf16.mxu0 0
          %942 = vmatpush1.bf16.msra.mxu0 0
          %943 = vmatprep.subr.bf16.mxu0 0
          %944 = vmatpush1.bf16.msra.mxu0 0
          %945 = vmatprep.subr.bf16.mxu0 0
          %946 = vmatpush1.bf16.msra.mxu0 0
          %947 = vmatprep.subr.bf16.mxu0 0
          %948 = vmatpush1.bf16.msra.mxu0 0
          %949 = vmatprep.subr.bf16.mxu0 0
          %950 = vmatpush1.bf16.msra.mxu0 0
          %951 = vmatprep.subr.bf16.mxu0 0
          %952 = vmatpush1.bf16.msra.mxu0 0
          %953 = vmatprep.mubr.bf16.mxu0 0
          %954 = vmatmul.mubr.bf16.gmra.mrb[0].mxu0 %v849
          %v955 = vpop.f32.mrb[0].mxu0
          %v956 = vadd.f32 %v871, %v955
          %v957 = vpop.f32.mrb[0].mxu0
          %v958 = vpop.f32.mrb[0].mxu0
          %v959 = vadd.f32 %v871, %v958
          %v960 = vpop.f32.mrb[0].mxu0
          %961 = vdwg.mxu0
          %962 = vst [vmem:[#allocation10] sm:$0xff] %v956
          %963 = vst [vmem:[#allocation10 + $0x8] sm:$0xff] %v959
        $region60: #{tpu_custom_call.1} parent=39 // pred_fallthru
          _
        // Predicated region
        $region61: #{tpu_custom_call.1} parent=39 // pred_check
          %p964 = pneg %p173
        $region62: #{tpu_custom_call.1} parent=39 // pred_check_branch
          %966 = sbr.rel (%p964) target = $region64
        $region63: #{tpu_custom_call.1} parent=39 // pred_region
          %s968 = ssub.s32 256, 256
          %969 = vsyncadd [#allocation5], %s968
          %s970 = smul.addr %s30, 2
          %s971 = smul.addr %s970, 128
          %s972 = scalar_lea.hbm %s5, %s971
          %s974 = sshll.u32 [#allocation9], 4
          %s975 = int_to_ptr.vmem [resolvable:$true] %s974
          %977 = dma.vmem_to_hbm [thread:$0]  %s975, 256, %s972, [#allocation5]
        $region64: #{tpu_custom_call.1} parent=39 // pred_fallthru
          _
        // Predicated region
        $region65: #{tpu_custom_call.1} parent=39 // pred_check
          %p978 = pneg %p199
        $region66: #{tpu_custom_call.1} parent=39 // pred_check_branch
          %980 = sbr.rel (%p978) target = $region68
        $region67: #{tpu_custom_call.1} parent=39 // pred_region
          %s982 = ssub.s32 256, 256
          %983 = vsyncadd [#allocation11], %s982
          %s984 = smul.addr %s30, 128
          %s985 = scalar_lea.hbm %s6, %s984
          %s986 = sshll.u32 [#allocation10], 4
          %s987 = int_to_ptr.vmem [resolvable:$true] %s986
          %992 = dma.vmem_to_hbm [thread:$0]  %s987, 256, %s985, [#allocation11], 128, 128, 8
        $region68: #{tpu_custom_call.1} parent=39 // pred_fallthru
          _
        // Predicated region
        $region69: #{tpu_custom_call.1} parent=39 // pred_check
          %p993 = pneg %p173
        $region70: #{tpu_custom_call.1} parent=39 // pred_check_branch
          %995 = sbr.rel (%p993) target = $region72
        $region71: #{tpu_custom_call.1} parent=39 // pred_region
          %996 = dma.done [#allocation5], 256
        $region72: #{tpu_custom_call.1} parent=39 // pred_fallthru
          _
        // Predicated region
        $region73: #{tpu_custom_call.1} parent=39 // pred_check
          %p997 = pneg %p199
        $region74: #{tpu_custom_call.1} parent=39 // pred_check_branch
          %999 = sbr.rel (%p997) target = $region76
        $region75: #{tpu_custom_call.1} parent=39 // pred_region
          %1000 = dma.done [#allocation11], 256
        $region76: #{tpu_custom_call.1} parent=39 // pred_fallthru
          _
      $region40: #{tpu_custom_call.1} parent=5 // pred_fallthru
        _
      %p1001 = scmp.le.s32.totalorder 2, %s21
      // Predicated region
      $region77: #{tpu_custom_call.1} parent=5 // pred_check
        %p1002 = pneg %p1001
      $region78: #{tpu_custom_call.1} parent=5 // pred_check_branch
        %1004 = sbr.rel (%p1002) target = $region80
      $region79: #{tpu_custom_call.1} parent=5 // pred_region
        %s1005 = ssub.s32 %s21, 2
      $region80: #{tpu_custom_call.1} parent=5 // pred_fallthru
        _
    $region6: #{tpu_custom_call.1} parent=1 // loop_footer
      %s25 = sadd.s32 1, %s21
    $region7: #{tpu_custom_call.1} parent=1 // loop_footer_branch
      %20 = sbr.rel target = $region3
    $region8: #{tpu_custom_call.1} parent=1 // loop_exit
      _
    %1006 = vsyncpa [#allocation4], 1
    %s1007 = scalar_lea.sflag [#allocation4], 1
    %1008 = vsyncpa %s1007, 1
    %1009 = vsyncpa [#allocation7], 1
    %s1010 = scalar_lea.sflag [#allocation7], 1
    %1011 = vsyncpa %s1010, 1
    %1012 = vsyncpa [#allocation5], 1
    %s1013 = scalar_lea.sflag [#allocation5], 1
    %1014 = vsyncpa %s1013, 1
    %1015 = vsyncpa [#allocation11], 1

</llo_original>
